<compile_context>
chip_gen: v5e
topology: v5e:2x2
jax: 0.10.0
libtpu: 0.0.40
codegen_flags: <defaults>
</compile_context>

<pallas_src>
import functools

import jax
import jax.numpy as jnp
from jax.experimental import pallas as pl
from jax.experimental.pallas import tpu as pltpu

# SELU constants (match torch.nn.SELU)
_SELU_ALPHA = 1.6732632423543772848170429916717
_SELU_SCALE = 1.0507009873554804934193349852946

_LANE = 128   # TPU lane width (last dim)
_SUBLANE = 8  # f32 sublane multiple (second-to-last dim)


def _round_up(n, m):
    return (n + m - 1) // m * m


def _selu(x):
    # exp only matters on the non-positive branch; clamping avoids
    # overflow-to-inf work in the discarded positive branch.
    safe = jnp.minimum(x, 0.0)
    return _SELU_SCALE * jnp.where(x > 0, x, _SELU_ALPHA * (jnp.exp(safe) - 1.0))


def generator_kernel(x_ref, w1_ref, b1_ref, w2_ref, b2_ref, w3_ref, b3_ref, o_ref):
    # x arrives f32; cast to bf16 in-register for the MXU (no extra HBM pass).
    x = x_ref[...].astype(jnp.bfloat16)
    # map1 + SELU (bf16 MXU matmul, f32 accumulate, f32 elementwise)
    h = jnp.dot(x, w1_ref[...], preferred_element_type=jnp.float32)
    h = _selu(h + b1_ref[...])
    # map2 + SELU
    h = jnp.dot(h.astype(jnp.bfloat16), w2_ref[...],
                preferred_element_type=jnp.float32)
    h = _selu(h + b2_ref[...])
    # map3 + SELU
    h = jnp.dot(h.astype(jnp.bfloat16), w3_ref[...],
                preferred_element_type=jnp.float32)
    h = _selu(h + b3_ref[...])
    o_ref[...] = h.astype(o_ref.dtype)


def prepare_params(params):
    """Pad feature dims to the 128-lane width and cast weights to bf16 ONCE.

    Weights are static across forward calls, so the pad/cast should not sit on
    the per-call critical path. Zero padding keeps padded feature columns
    exactly zero through every layer (SELU(0) == 0).
    """
    w1, b1 = params["w1"], params["b1"]
    w2, b2 = params["w2"], params["b2"]
    w3, b3 = params["w3"], params["b3"]
    in_size, hid_size = w1.shape
    out_size = w3.shape[1]
    in_p = _round_up(in_size, _LANE)
    hid_p = _round_up(hid_size, _LANE)
    out_p = _round_up(out_size, _LANE)

    def pad2(a, rows, cols):
        return jnp.pad(a, ((0, rows - a.shape[0]), (0, cols - a.shape[1])))

    prepared = {
        "w1": pad2(w1, in_p, hid_p).astype(jnp.bfloat16),
        "w2": pad2(w2, hid_p, hid_p).astype(jnp.bfloat16),
        "w3": pad2(w3, hid_p, out_p).astype(jnp.bfloat16),
        "b1": pad2(b1, 1, hid_p).astype(jnp.float32),
        "b2": pad2(b2, 1, hid_p).astype(jnp.float32),
        "b3": pad2(b3, 1, out_p).astype(jnp.float32),
    }
    dims = {"in_size": in_size, "hid_size": hid_size, "out_size": out_size,
            "in_p": in_p, "hid_p": hid_p, "out_p": out_p}
    return prepared, dims


@functools.partial(jax.jit, static_argnames=("out_size", "tile_b"))
def _forward_impl(x, w1, b1, w2, b2, w3, b3, *, out_size, tile_b):
    B, in_size = x.shape
    in_p, hid_p = w1.shape
    out_p = w3.shape[1]

    # Batch tile: no forced 128 minimum; only the f32 sublane multiple (8).
    tb = _round_up(max(1, min(B, tile_b)), _SUBLANE)
    grid = (pl.cdiv(B, tb),)  # last block may be partial; its store is masked.

    # Pad only the feature (lane) dim of x; keep f32, cast in-kernel.
    x_p = x if in_p == in_size else jnp.pad(x, ((0, 0), (0, in_p - in_size)))

    # Grid-invariant operands: single-buffered (no re-DMA across grid steps).
    def resident(shape):
        return pl.BlockSpec(shape, lambda i: (0, 0), pipeline_mode=pl.Buffered(1))

    # VMEM footprint: double-buffered x/out tiles + single-buffered weights.
    footprint = (2 * tb * in_p * 4 + 2 * tb * out_p * 4
                 + (in_p * hid_p + hid_p * hid_p + hid_p * out_p) * 2
                 + (2 * hid_p + out_p) * 4)
    # >= 32 MiB default scoped, never above v7x's 64 MiB physical.
    vmem_limit = int(min(60 * 1024 * 1024, max(32 * 1024 * 1024, 2 * footprint)))

    out = pl.pallas_call(
        generator_kernel,
        out_shape=jax.ShapeDtypeStruct((B, out_p), jnp.float32),
        grid=grid,
        in_specs=[
            # batch-tiled activation input (f32 in HBM, bf16 cast in-kernel)
            pl.BlockSpec((tb, in_p), lambda i: (i, 0)),
            # resident weights / biases (same block every grid step)
            resident((in_p, hid_p)),
            resident((1, hid_p)),
            resident((hid_p, hid_p)),
            resident((1, hid_p)),
            resident((hid_p, out_p)),
            resident((1, out_p)),
        ],
        out_specs=pl.BlockSpec((tb, out_p), lambda i: (i, 0)),
        compiler_params=pltpu.CompilerParams(
            dimension_semantics=("parallel",),  # shard batch grid over TCs (v7x)
            vmem_limit_bytes=vmem_limit,
        ),
    )(x_p, w1, b1, w2, b2, w3, b3)

    return out[:, :out_size]


def generator_forward(x, prepared, dims, *, tile_b=256):
    """x: [B, input_size] float32; prepared/dims from prepare_params()."""
    return _forward_impl(
        x, prepared["w1"], prepared["b1"], prepared["w2"], prepared["b2"],
        prepared["w3"], prepared["b3"],
        out_size=dims["out_size"], tile_b=tile_b)


def init_params(key, input_size, hidden_size, output_size):
    """Deterministic, PyTorch-Linear-style uniform init (synthetic weights)."""
    ks = jax.random.split(key, 6)

    def linear(kw, kb, fan_in, fan_out):
        bound = 1.0 / jnp.sqrt(float(fan_in))
        w = jax.random.uniform(kw, (fan_in, fan_out), jnp.float32, -bound, bound)
        b = jax.random.uniform(kb, (1, fan_out), jnp.float32, -bound, bound)
        return w, b

    w1, b1 = linear(ks[0], ks[1], input_size, hidden_size)
    w2, b2 = linear(ks[2], ks[3], hidden_size, hidden_size)
    w3, b3 = linear(ks[4], ks[5], hidden_size, output_size)
    return {"w1": w1, "b1": b1, "w2": w2, "b2": b2, "w3": w3, "b3": b3}


def _reference_f32(x, p):
    """Pure-f32 reference matching the PyTorch module semantics."""
    h = _selu(x @ p["w1"] + p["b1"])
    h = _selu(h @ p["w2"] + p["b2"])
    return _selu(h @ p["w3"] + p["b3"])


def _reference_bf16(x, p):
    """Reference mirroring the kernel's bf16-matmul / f32-accumulate math."""
    def mm(a, w):
        return jnp.dot(a.astype(jnp.bfloat16), w.astype(jnp.bfloat16),
                       preferred_element_type=jnp.float32)

    h = _selu(mm(x, p["w1"]) + p["b1"])
    h = _selu(mm(h, p["w2"]) + p["b2"])
    return _selu(mm(h, p["w3"]) + p["b3"])


if __name__ == "__main__":
    key = jax.random.PRNGKey(0)
    k_x, k_p = jax.random.split(key)

    batch, input_size, hidden_size, output_size = 8, 4, 32, 4
    x = jax.random.normal(k_x, (batch, input_size), dtype=jnp.float32)
    params = init_params(k_p, input_size, hidden_size, output_size)

    # One-time weight prep (pad to lane width + bf16 cast).
    prepared, dims = prepare_params(params)

    out = generator_forward(x, prepared, dims)
    out = jax.block_until_ready(out)

    assert out.shape == (batch, output_size)
    # Tight check against a reference that mirrors the kernel's bf16 matmuls.
    ref_bf16 = _reference_bf16(x, params)
    assert jnp.allclose(out, ref_bf16, atol=2e-3, rtol=2e-3)
    # Loose check against the pure-f32 PyTorch-equivalent semantics.
    # TODO(synk): if bit-level parity with torch f32 nn.Linear is required,
    # keep the matmuls in f32 instead of bf16 and tighten this tolerance.
    ref_f32 = _reference_f32(x, params)
    assert jnp.allclose(out, ref_f32, atol=5e-2, rtol=5e-2)

    print("KERNEL_OK")
</pallas_src>

<mosaic_0001>
module attributes {stable_mosaic.version = 11 : i64} {
  func.func @generator_kernel(%arg0: i32, %arg1: memref<8x128xf32, #tpu.memory_space<vmem>>, %arg2: memref<128x128xbf16, #tpu.memory_space<vmem>>, %arg3: memref<1x128xf32, #tpu.memory_space<vmem>>, %arg4: memref<128x128xbf16, #tpu.memory_space<vmem>>, %arg5: memref<1x128xf32, #tpu.memory_space<vmem>>, %arg6: memref<128x128xbf16, #tpu.memory_space<vmem>>, %arg7: memref<1x128xf32, #tpu.memory_space<vmem>>, %arg8: memref<8x128xf32, #tpu.memory_space<vmem>>) attributes {dimension_semantics = [#tpu.dimension_semantics<parallel>], iteration_bounds = array<i64: 1>, scalar_prefetch = 0 : i64, scratch_operands = 0 : i64, tpu.core_type = #tpu.core_type<tc>, window_params = [{transform_indices = @transform_0, window_bounds = array<i64: 8, 128>}, {pipeline_mode = #tpu.pipeline_mode<synchronous>, transform_indices = @transform_1, window_bounds = array<i64: 128, 128>}, {pipeline_mode = #tpu.pipeline_mode<synchronous>, transform_indices = @transform_2, window_bounds = array<i64: 1, 128>}, {pipeline_mode = #tpu.pipeline_mode<synchronous>, transform_indices = @transform_3, window_bounds = array<i64: 128, 128>}, {pipeline_mode = #tpu.pipeline_mode<synchronous>, transform_indices = @transform_4, window_bounds = array<i64: 1, 128>}, {pipeline_mode = #tpu.pipeline_mode<synchronous>, transform_indices = @transform_5, window_bounds = array<i64: 128, 128>}, {pipeline_mode = #tpu.pipeline_mode<synchronous>, transform_indices = @transform_6, window_bounds = array<i64: 1, 128>}, {transform_indices = @transform_7, window_bounds = array<i64: 8, 128>}]} {
    %c0 = arith.constant 0 : index
    %c0_0 = arith.constant 0 : index
    %0 = vector.load %arg1[%c0, %c0_0] : memref<8x128xf32, #tpu.memory_space<vmem>>, vector<8x128xf32>
    %1 = arith.truncf %0 : vector<8x128xf32> to vector<8x128xbf16>
    %c0_1 = arith.constant 0 : index
    %c0_2 = arith.constant 0 : index
    %2 = vector.load %arg2[%c0_1, %c0_2] : memref<128x128xbf16, #tpu.memory_space<vmem>>, vector<128x128xbf16>
    %cst = arith.constant dense<0.000000e+00> : vector<8x128xf32>
    %3 = tpu.matmul %1, %2, %cst {dimension_numbers = #tpu.dot_dimension_numbers<[1], [0], [0], [1], [0, 0, 1, 1], [], []>} : vector<8x128xbf16>, vector<128x128xbf16>, vector<8x128xf32> -> vector<8x128xf32>
    %c0_3 = arith.constant 0 : index
    %c0_4 = arith.constant 0 : index
    %4 = vector.load %arg3[%c0_3, %c0_4] : memref<1x128xf32, #tpu.memory_space<vmem>>, vector<1x128xf32>
    %5 = vector.broadcast %4 : vector<1x128xf32> to vector<8x128xf32>
    %6 = arith.addf %3, %5 : vector<8x128xf32>
    %cst_5 = arith.constant 0.000000e+00 : f32
    %7 = vector.broadcast %cst_5 : f32 to vector<8x128xf32>
    %8 = arith.minimumf %6, %7 : vector<8x128xf32>
    %cst_6 = arith.constant 0.000000e+00 : f32
    %9 = vector.broadcast %cst_6 : f32 to vector<8x128xf32>
    %10 = arith.cmpf ogt, %6, %9 : vector<8x128xf32>
    %11 = math.exp %8 : vector<8x128xf32>
    %cst_7 = arith.constant 1.000000e+00 : f32
    %12 = vector.broadcast %cst_7 : f32 to vector<8x128xf32>
    %13 = arith.subf %11, %12 : vector<8x128xf32>
    %cst_8 = arith.constant 1.67326319 : f32
    %14 = vector.broadcast %cst_8 : f32 to vector<8x128xf32>
    %15 = arith.mulf %14, %13 : vector<8x128xf32>
    %16 = arith.select %10, %6, %15 : vector<8x128xi1>, vector<8x128xf32>
    %cst_9 = arith.constant 1.05070102 : f32
    %17 = vector.broadcast %cst_9 : f32 to vector<8x128xf32>
    %18 = arith.mulf %17, %16 : vector<8x128xf32>
    %19 = arith.truncf %18 : vector<8x128xf32> to vector<8x128xbf16>
    %c0_10 = arith.constant 0 : index
    %c0_11 = arith.constant 0 : index
    %20 = vector.load %arg4[%c0_10, %c0_11] : memref<128x128xbf16, #tpu.memory_space<vmem>>, vector<128x128xbf16>
    %cst_12 = arith.constant dense<0.000000e+00> : vector<8x128xf32>
    %21 = tpu.matmul %19, %20, %cst_12 {dimension_numbers = #tpu.dot_dimension_numbers<[1], [0], [0], [1], [0, 0, 1, 1], [], []>} : vector<8x128xbf16>, vector<128x128xbf16>, vector<8x128xf32> -> vector<8x128xf32>
    %c0_13 = arith.constant 0 : index
    %c0_14 = arith.constant 0 : index
    %22 = vector.load %arg5[%c0_13, %c0_14] : memref<1x128xf32, #tpu.memory_space<vmem>>, vector<1x128xf32>
    %23 = vector.broadcast %22 : vector<1x128xf32> to vector<8x128xf32>
    %24 = arith.addf %21, %23 : vector<8x128xf32>
    %cst_15 = arith.constant 0.000000e+00 : f32
    %25 = vector.broadcast %cst_15 : f32 to vector<8x128xf32>
    %26 = arith.minimumf %24, %25 : vector<8x128xf32>
    %cst_16 = arith.constant 0.000000e+00 : f32
    %27 = vector.broadcast %cst_16 : f32 to vector<8x128xf32>
    %28 = arith.cmpf ogt, %24, %27 : vector<8x128xf32>
    %29 = math.exp %26 : vector<8x128xf32>
    %cst_17 = arith.constant 1.000000e+00 : f32
    %30 = vector.broadcast %cst_17 : f32 to vector<8x128xf32>
    %31 = arith.subf %29, %30 : vector<8x128xf32>
    %cst_18 = arith.constant 1.67326319 : f32
    %32 = vector.broadcast %cst_18 : f32 to vector<8x128xf32>
    %33 = arith.mulf %32, %31 : vector<8x128xf32>
    %34 = arith.select %28, %24, %33 : vector<8x128xi1>, vector<8x128xf32>
    %cst_19 = arith.constant 1.05070102 : f32
    %35 = vector.broadcast %cst_19 : f32 to vector<8x128xf32>
    %36 = arith.mulf %35, %34 : vector<8x128xf32>
    %37 = arith.truncf %36 : vector<8x128xf32> to vector<8x128xbf16>
    %c0_20 = arith.constant 0 : index
    %c0_21 = arith.constant 0 : index
    %38 = vector.load %arg6[%c0_20, %c0_21] : memref<128x128xbf16, #tpu.memory_space<vmem>>, vector<128x128xbf16>
    %cst_22 = arith.constant dense<0.000000e+00> : vector<8x128xf32>
    %39 = tpu.matmul %37, %38, %cst_22 {dimension_numbers = #tpu.dot_dimension_numbers<[1], [0], [0], [1], [0, 0, 1, 1], [], []>} : vector<8x128xbf16>, vector<128x128xbf16>, vector<8x128xf32> -> vector<8x128xf32>
    %c0_23 = arith.constant 0 : index
    %c0_24 = arith.constant 0 : index
    %40 = vector.load %arg7[%c0_23, %c0_24] : memref<1x128xf32, #tpu.memory_space<vmem>>, vector<1x128xf32>
    %41 = vector.broadcast %40 : vector<1x128xf32> to vector<8x128xf32>
    %42 = arith.addf %39, %41 : vector<8x128xf32>
    %cst_25 = arith.constant 0.000000e+00 : f32
    %43 = vector.broadcast %cst_25 : f32 to vector<8x128xf32>
    %44 = arith.minimumf %42, %43 : vector<8x128xf32>
    %cst_26 = arith.constant 0.000000e+00 : f32
    %45 = vector.broadcast %cst_26 : f32 to vector<8x128xf32>
    %46 = arith.cmpf ogt, %42, %45 : vector<8x128xf32>
    %47 = math.exp %44 : vector<8x128xf32>
    %cst_27 = arith.constant 1.000000e+00 : f32
    %48 = vector.broadcast %cst_27 : f32 to vector<8x128xf32>
    %49 = arith.subf %47, %48 : vector<8x128xf32>
    %cst_28 = arith.constant 1.67326319 : f32
    %50 = vector.broadcast %cst_28 : f32 to vector<8x128xf32>
    %51 = arith.mulf %50, %49 : vector<8x128xf32>
    %52 = arith.select %46, %42, %51 : vector<8x128xi1>, vector<8x128xf32>
    %cst_29 = arith.constant 1.05070102 : f32
    %53 = vector.broadcast %cst_29 : f32 to vector<8x128xf32>
    %54 = arith.mulf %53, %52 : vector<8x128xf32>
    %c0_30 = arith.constant 0 : index
    %c0_31 = arith.constant 0 : index
    %55 = vector.load %arg8[%c0_30, %c0_31] : memref<8x128xf32, #tpu.memory_space<vmem>>, vector<8x128xf32>
    tpu.vector_store %arg8[%c0_30, %c0_31], %54 {strides = array<i32>} : memref<8x128xf32, #tpu.memory_space<vmem>>, vector<8x128xf32>,
    return
  }
  func.func @transform_0(%arg0: i32) -> (i32, i32) {
    %c0_i32 = arith.constant 0 : i32
    %c0_i32_0 = arith.constant 0 : i32
    return %arg0, %c0_i32 : i32, i32
  }
  func.func @transform_1(%arg0: i32) -> (i32, i32) {
    %c0_i32 = arith.constant 0 : i32
    %c0_i32_0 = arith.constant 0 : i32
    %c0_i32_1 = arith.constant 0 : i32
    return %c0_i32, %c0_i32_0 : i32, i32
  }
  func.func @transform_2(%arg0: i32) -> (i32, i32) {
    %c0_i32 = arith.constant 0 : i32
    %c0_i32_0 = arith.constant 0 : i32
    %c0_i32_1 = arith.constant 0 : i32
    return %c0_i32, %c0_i32_0 : i32, i32
  }
  func.func @transform_3(%arg0: i32) -> (i32, i32) {
    %c0_i32 = arith.constant 0 : i32
    %c0_i32_0 = arith.constant 0 : i32
    %c0_i32_1 = arith.constant 0 : i32
    return %c0_i32, %c0_i32_0 : i32, i32
  }
  func.func @transform_4(%arg0: i32) -> (i32, i32) {
    %c0_i32 = arith.constant 0 : i32
    %c0_i32_0 = arith.constant 0 : i32
    %c0_i32_1 = arith.constant 0 : i32
    return %c0_i32, %c0_i32_0 : i32, i32
  }
  func.func @transform_5(%arg0: i32) -> (i32, i32) {
    %c0_i32 = arith.constant 0 : i32
    %c0_i32_0 = arith.constant 0 : i32
    %c0_i32_1 = arith.constant 0 : i32
    return %c0_i32, %c0_i32_0 : i32, i32
  }
  func.func @transform_6(%arg0: i32) -> (i32, i32) {
    %c0_i32 = arith.constant 0 : i32
    %c0_i32_0 = arith.constant 0 : i32
    %c0_i32_1 = arith.constant 0 : i32
    return %c0_i32, %c0_i32_0 : i32, i32
  }
  func.func @transform_7(%arg0: i32) -> (i32, i32) {
    %c0_i32 = arith.constant 0 : i32
    %c0_i32_0 = arith.constant 0 : i32
    return %arg0, %c0_i32 : i32, i32
  }
}

</mosaic_0001>

<llo_original>
// kernel: _forward_impl.1
$region0: #{_forward_impl.1}
  #allocation0 [shape = 'u32[]', space=smem, size = 0x4, offset = 0x4, fixed_abs, tag = 'smem constant byte address 0x4 - core index']
  #allocation1 [shape = 'u32[72,128]{1,0:T(1,128)}', space=vmem, size = 0x9000, scoped, tag = 'internal scratch']
  %s0 = inlined_call_operand.vmem [shape: f32[8,128], index: 0, kind: input, shape index: {}]
  %s1 = inlined_call_operand.hbm [shape: bf16[128,128], index: 1, kind: input, shape index: {}]
  %s2 = inlined_call_operand.vmem [shape: f32[1,128], index: 2, kind: input, shape index: {}]
  %s3 = inlined_call_operand.hbm [shape: bf16[128,128], index: 3, kind: input, shape index: {}]
  %s4 = inlined_call_operand.vmem [shape: f32[1,128], index: 4, kind: input, shape index: {}]
  %s5 = inlined_call_operand.hbm [shape: bf16[128,128], index: 5, kind: input, shape index: {}]
  %s6 = inlined_call_operand.vmem [shape: f32[1,128], index: 6, kind: input, shape index: {}]
  %s7 = inlined_call_operand.vmem [shape: f32[8,128], index: 7, kind: output, shape index: {}]
  %s8 = sld [smem:[#allocation0]]
  $region50: #{_forward_impl.1} parent=0
    _
  %s10 = ssub.s32 1, %s8
  %s11 = scalar_select 0, %s10, %s8
  $region1: #{_forward_impl.1} parent=0
    #allocation2 [shape = 'u8[32768]{0}', space=vmem, size = 0x8000, scoped, tag = 'input window, operand 1, single buffered']
    #allocation3 [shape = 's32[1]{0}', space=sflag, size = 0x4, scoped, tag = 'scoped memory for _forward_impl.1']
    #allocation4 [shape = 'u8[32768]{0}', space=vmem, size = 0x8000, scoped, tag = 'input window, operand 3, single buffered']
    #allocation5 [shape = 's32[1]{0}', space=sflag, size = 0x4, scoped, tag = 'scoped memory for _forward_impl.1']
    #allocation6 [shape = 'u8[32768]{0}', space=vmem, size = 0x8000, scoped, tag = 'input window, operand 5, single buffered']
    %12 = vsyncpa [#allocation3], 0
    %13 = vsyncpa [#allocation5], 0
    // Predicated region
    $region2: #{_forward_impl.1} parent=1 // pred_check
      _
    $region3: #{_forward_impl.1} parent=1 // pred_check_branch
      %15 = sbr.rel (0) target = $region5
    $region4: #{_forward_impl.1} parent=1 // pred_region
      _
    $region5: #{_forward_impl.1} parent=1 // pred_fallthru
      _
    // Predicated region
    $region6: #{_forward_impl.1} parent=1 // pred_check
      _
    $region7: #{_forward_impl.1} parent=1 // pred_check_branch
      %17 = sbr.rel (0) target = $region9
    $region8: #{_forward_impl.1} parent=1 // pred_region
      %19 = vsyncadd [#allocation3], 0
      %s20 = sshll.u32 %s1, 4
      %s21 = int_to_ptr.hbm [resolvable:$true] %s20
      %s22 = sshll.u32 [#allocation2], 4
      %s23 = int_to_ptr.vmem [resolvable:$true] %s22
      %28 = dma.hbm_to_vmem [thread:$0]  %s21, 1024, %s23, [#allocation3], 64, 64, 4
    $region9: #{_forward_impl.1} parent=1 // pred_fallthru
      _
    // Predicated region
    $region10: #{_forward_impl.1} parent=1 // pred_check
      _
    $region11: #{_forward_impl.1} parent=1 // pred_check_branch
      %30 = sbr.rel (0) target = $region13
    $region12: #{_forward_impl.1} parent=1 // pred_region
      _
    $region13: #{_forward_impl.1} parent=1 // pred_fallthru
      _
    // Predicated region
    $region14: #{_forward_impl.1} parent=1 // pred_check
      _
    $region15: #{_forward_impl.1} parent=1 // pred_check_branch
      %32 = sbr.rel (0) target = $region17
    $region16: #{_forward_impl.1} parent=1 // pred_region
      %34 = vsyncadd [#allocation5], 0
      %s35 = sshll.u32 %s3, 4
      %s36 = int_to_ptr.hbm [resolvable:$true] %s35
      %s37 = sshll.u32 [#allocation4], 4
      %s38 = int_to_ptr.vmem [resolvable:$true] %s37
      %43 = dma.hbm_to_vmem [thread:$0]  %s36, 1024, %s38, [#allocation5], 64, 64, 4
    $region17: #{_forward_impl.1} parent=1 // pred_fallthru
      _
    // Predicated region
    $region18: #{_forward_impl.1} parent=1 // pred_check
      _
    $region19: #{_forward_impl.1} parent=1 // pred_check_branch
      %45 = sbr.rel (0) target = $region21
    $region20: #{_forward_impl.1} parent=1 // pred_region
      _
    $region21: #{_forward_impl.1} parent=1 // pred_fallthru
      _
    // Predicated region
    $region22: #{_forward_impl.1} parent=1 // pred_check
      _
    $region23: #{_forward_impl.1} parent=1 // pred_check_branch
      %47 = sbr.rel (0) target = $region25
    $region24: #{_forward_impl.1} parent=1 // pred_region
      %49 = vsyncadd [#allocation5], 0
      %s50 = sshll.u32 %s5, 4
      %s51 = int_to_ptr.hbm [resolvable:$true] %s50
      %s52 = sshll.u32 [#allocation6], 4
      %s53 = int_to_ptr.vmem [resolvable:$true] %s52
      %58 = dma.hbm_to_vmem [thread:$0]  %s51, 1024, %s53, [#allocation5], 64, 64, 4
    $region25: #{_forward_impl.1} parent=1 // pred_fallthru
      _
    // Predicated region
    $region26: #{_forward_impl.1} parent=1 // pred_check
      _
    $region27: #{_forward_impl.1} parent=1 // pred_check_branch
      %60 = sbr.rel (0) target = $region29
    $region28: #{_forward_impl.1} parent=1 // pred_region
      _
    $region29: #{_forward_impl.1} parent=1 // pred_fallthru
      _
    // Predicated region
    $region30: #{_forward_impl.1} parent=1 // pred_check
      _
    $region31: #{_forward_impl.1} parent=1 // pred_check_branch
      %62 = sbr.rel (0) target = $region33
    $region32: #{_forward_impl.1} parent=1 // pred_region
      %64 = dma.done [#allocation3], 1024
    $region33: #{_forward_impl.1} parent=1 // pred_fallthru
      _
    // Predicated region
    $region34: #{_forward_impl.1} parent=1 // pred_check
      _
    $region35: #{_forward_impl.1} parent=1 // pred_check_branch
      %66 = sbr.rel (0) target = $region37
    $region36: #{_forward_impl.1} parent=1 // pred_region
      %68 = dma.done [#allocation5], 1024
    $region37: #{_forward_impl.1} parent=1 // pred_fallthru
      _
    // Predicated region
    $region38: #{_forward_impl.1} parent=1 // pred_check
      _
    $region39: #{_forward_impl.1} parent=1 // pred_check_branch
      %70 = sbr.rel (0) target = $region41
    $region40: #{_forward_impl.1} parent=1 // pred_region
      %72 = dma.done [#allocation5], 1024
    $region41: #{_forward_impl.1} parent=1 // pred_fallthru
      _
    %v73 = vld [vmem:[%s0] sm:$0xff]
    %v74 = vpack.c.bf16 %v73, %v73
    %v75 = vld [vmem:[#allocation2] sm:$0xf]
    %v76 = vld [vmem:[#allocation2 + $0x4] sm:$0xf]
    %v77 = vld [vmem:[#allocation2 + $0x8] sm:$0xf]
    %v78 = vld [vmem:[#allocation2 + $0xc] sm:$0xf]
    %v79 = vld [vmem:[#allocation2 + $0x10] sm:$0xf]
    %v80 = vld [vmem:[#allocation2 + $0x14] sm:$0xf]
    %v81 = vld [vmem:[#allocation2 + $0x18] sm:$0xf]
    %v82 = vld [vmem:[#allocation2 + $0x1c] sm:$0xf]
    %v83 = vld [vmem:[#allocation2 + $0x20] sm:$0xf]
    %v84 = vld [vmem:[#allocation2 + $0x24] sm:$0xf]
    %v85 = vld [vmem:[#allocation2 + $0x28] sm:$0xf]
    %v86 = vld [vmem:[#allocation2 + $0x2c] sm:$0xf]
    %v87 = vld [vmem:[#allocation2 + $0x30] sm:$0xf]
    %v88 = vld [vmem:[#allocation2 + $0x34] sm:$0xf]
    %v89 = vld [vmem:[#allocation2 + $0x38] sm:$0xf]
    %v90 = vld [vmem:[#allocation2 + $0x3c] sm:$0xf]
    %v91 = vld [vmem:[%s2] sm:$0x1]
    %v93 = vperm.slane %v91, 0
    %v111 = vunpack.c.l.b16 %v75
    %v112 = vunpack.c.l.b16 %v76
    %v113 = vunpack.c.l.b16 %v77
    %v114 = vunpack.c.l.b16 %v78
    %v115 = vunpack.c.l.b16 %v79
    %v116 = vunpack.c.l.b16 %v80
    %v117 = vunpack.c.l.b16 %v81
    %v118 = vunpack.c.l.b16 %v82
    %v119 = vunpack.c.l.b16 %v83
    %v120 = vunpack.c.l.b16 %v84
    %v121 = vunpack.c.l.b16 %v85
    %v122 = vunpack.c.l.b16 %v86
    %v123 = vunpack.c.l.b16 %v87
    %v124 = vunpack.c.l.b16 %v88
    %v125 = vunpack.c.l.b16 %v89
    %v126 = vunpack.c.l.b16 %v90
    %v127 = vpack.c.b16 %v112, %v111
    %v128 = vpack.c.b16 %v114, %v113
    %v129 = vpack.c.b16 %v116, %v115
    %v130 = vpack.c.b16 %v118, %v117
    %v131 = vpack.c.b16 %v120, %v119
    %v132 = vpack.c.b16 %v122, %v121
    %v133 = vpack.c.b16 %v124, %v123
    %v134 = vpack.c.b16 %v126, %v125
    %143 = vmatpush.bf16.msra.mxu0 %v134
    %144 = vmatpush.bf16.msra.mxu0 %v133
    %145 = vmatpush.bf16.msra.mxu0 %v132
    %146 = vmatpush.bf16.msra.mxu0 %v131
    %147 = vmatpush.bf16.msra.mxu0 %v130
    %148 = vmatpush.bf16.msra.mxu0 %v129
    %149 = vmatpush.bf16.msra.mxu0 %v128
    %150 = vmatpush.bf16.msra.mxu0 %v127
    %151 = vmatmul.bf16.gmra.mxu0 %v74
    %v152 = vpop.f32.mrf.mxu0
    %v153 = vadd.f32 %v93, %v152
    %v154 = vpop.f32.mrf.mxu0
    %155 = vdwg.mxu0
    %v156 = vmin.f32 %v153, 0.0
    %vm157 = vcmp.gt.f32.partialorder %v153, 0.0
    %v158 = vmul.f32 %v156, 1.442695
    %v159 = vpow.pop %v158
    %v160 = vsub.f32 %v159, 1.0
    %v161 = vmul.f32 %v160, 1.6732632
    %v162 = vsel %vm157, %v153, %v161
    %v163 = vmul.f32 %v162, 1.050701
    %v164 = vpack.c.bf16 %v163, %v163
    %v165 = vld [vmem:[#allocation4] sm:$0xf]
    %v166 = vld [vmem:[#allocation4 + $0x4] sm:$0xf]
    %v167 = vld [vmem:[#allocation4 + $0x8] sm:$0xf]
    %v168 = vld [vmem:[#allocation4 + $0xc] sm:$0xf]
    %v169 = vld [vmem:[#allocation4 + $0x10] sm:$0xf]
    %v170 = vld [vmem:[#allocation4 + $0x14] sm:$0xf]
    %v171 = vld [vmem:[#allocation4 + $0x18] sm:$0xf]
    %v172 = vld [vmem:[#allocation4 + $0x1c] sm:$0xf]
    %v173 = vld [vmem:[#allocation4 + $0x20] sm:$0xf]
    %v174 = vld [vmem:[#allocation4 + $0x24] sm:$0xf]
    %v175 = vld [vmem:[#allocation4 + $0x28] sm:$0xf]
    %v176 = vld [vmem:[#allocation4 + $0x2c] sm:$0xf]
    %v177 = vld [vmem:[#allocation4 + $0x30] sm:$0xf]
    %v178 = vld [vmem:[#allocation4 + $0x34] sm:$0xf]
    %v179 = vld [vmem:[#allocation4 + $0x38] sm:$0xf]
    %v180 = vld [vmem:[#allocation4 + $0x3c] sm:$0xf]
    %v181 = vld [vmem:[%s4] sm:$0x1]
    %v183 = vperm.slane %v181, 0
    %v201 = vunpack.c.l.b16 %v165
    %v202 = vunpack.c.l.b16 %v166
    %v203 = vunpack.c.l.b16 %v167
    %v204 = vunpack.c.l.b16 %v168
    %v205 = vunpack.c.l.b16 %v169
    %v206 = vunpack.c.l.b16 %v170
    %v207 = vunpack.c.l.b16 %v171
    %v208 = vunpack.c.l.b16 %v172
    %v209 = vunpack.c.l.b16 %v173
    %v210 = vunpack.c.l.b16 %v174
    %v211 = vunpack.c.l.b16 %v175
    %v212 = vunpack.c.l.b16 %v176
    %v213 = vunpack.c.l.b16 %v177
    %v214 = vunpack.c.l.b16 %v178
    %v215 = vunpack.c.l.b16 %v179
    %v216 = vunpack.c.l.b16 %v180
    %v217 = vpack.c.b16 %v202, %v201
    %v218 = vpack.c.b16 %v204, %v203
    %v219 = vpack.c.b16 %v206, %v205
    %v220 = vpack.c.b16 %v208, %v207
    %v221 = vpack.c.b16 %v210, %v209
    %v222 = vpack.c.b16 %v212, %v211
    %v223 = vpack.c.b16 %v214, %v213
    %v224 = vpack.c.b16 %v216, %v215
    %233 = vmatpush.bf16.msra.mxu0 %v224
    %234 = vmatpush.bf16.msra.mxu0 %v223
    %235 = vmatpush.bf16.msra.mxu0 %v222
    %236 = vmatpush.bf16.msra.mxu0 %v221
    %237 = vmatpush.bf16.msra.mxu0 %v220
    %238 = vmatpush.bf16.msra.mxu0 %v219
    %239 = vmatpush.bf16.msra.mxu0 %v218
    %240 = vmatpush.bf16.msra.mxu0 %v217
    %241 = vmatmul.bf16.gmra.mxu0 %v164
    %v242 = vpop.f32.mrf.mxu0
    %v243 = vadd.f32 %v183, %v242
    %v244 = vpop.f32.mrf.mxu0
    %245 = vdwg.mxu0
    %v246 = vmin.f32 %v243, 0.0
    %vm247 = vcmp.gt.f32.partialorder %v243, 0.0
    %v248 = vmul.f32 %v246, 1.442695
    %v249 = vpow.pop %v248
    %v250 = vsub.f32 %v249, 1.0
    %v251 = vmul.f32 %v250, 1.6732632
    %v252 = vsel %vm247, %v243, %v251
    %v253 = vmul.f32 %v252, 1.050701
    %v254 = vpack.c.bf16 %v253, %v253
    %v255 = vld [vmem:[#allocation6] sm:$0xf]
    %v256 = vld [vmem:[#allocation6 + $0x4] sm:$0xf]
    %v257 = vld [vmem:[#allocation6 + $0x8] sm:$0xf]
    %v258 = vld [vmem:[#allocation6 + $0xc] sm:$0xf]
    %v259 = vld [vmem:[#allocation6 + $0x10] sm:$0xf]
    %v260 = vld [vmem:[#allocation6 + $0x14] sm:$0xf]
    %v261 = vld [vmem:[#allocation6 + $0x18] sm:$0xf]
    %v262 = vld [vmem:[#allocation6 + $0x1c] sm:$0xf]
    %v263 = vld [vmem:[#allocation6 + $0x20] sm:$0xf]
    %v264 = vld [vmem:[#allocation6 + $0x24] sm:$0xf]
    %v265 = vld [vmem:[#allocation6 + $0x28] sm:$0xf]
    %v266 = vld [vmem:[#allocation6 + $0x2c] sm:$0xf]
    %v267 = vld [vmem:[#allocation6 + $0x30] sm:$0xf]
    %v268 = vld [vmem:[#allocation6 + $0x34] sm:$0xf]
    %v269 = vld [vmem:[#allocation6 + $0x38] sm:$0xf]
    %v270 = vld [vmem:[#allocation6 + $0x3c] sm:$0xf]
    %v271 = vld [vmem:[%s6] sm:$0x1]
    %v273 = vperm.slane %v271, 0
    %v291 = vunpack.c.l.b16 %v255
    %v292 = vunpack.c.l.b16 %v256
    %v293 = vunpack.c.l.b16 %v257
    %v294 = vunpack.c.l.b16 %v258
    %v295 = vunpack.c.l.b16 %v259
    %v296 = vunpack.c.l.b16 %v260
    %v297 = vunpack.c.l.b16 %v261
    %v298 = vunpack.c.l.b16 %v262
    %v299 = vunpack.c.l.b16 %v263
    %v300 = vunpack.c.l.b16 %v264
    %v301 = vunpack.c.l.b16 %v265
    %v302 = vunpack.c.l.b16 %v266
    %v303 = vunpack.c.l.b16 %v267
    %v304 = vunpack.c.l.b16 %v268
    %v305 = vunpack.c.l.b16 %v269
    %v306 = vunpack.c.l.b16 %v270
    %v307 = vpack.c.b16 %v292, %v291
    %v308 = vpack.c.b16 %v294, %v293
    %v309 = vpack.c.b16 %v296, %v295
    %v310 = vpack.c.b16 %v298, %v297
    %v311 = vpack.c.b16 %v300, %v299
    %v312 = vpack.c.b16 %v302, %v301
    %v313 = vpack.c.b16 %v304, %v303
    %v314 = vpack.c.b16 %v306, %v305
    %323 = vmatpush.bf16.msra.mxu0 %v314
    %324 = vmatpush.bf16.msra.mxu0 %v313
    %325 = vmatpush.bf16.msra.mxu0 %v312
    %326 = vmatpush.bf16.msra.mxu0 %v311
    %327 = vmatpush.bf16.msra.mxu0 %v310
    %328 = vmatpush.bf16.msra.mxu0 %v309
    %329 = vmatpush.bf16.msra.mxu0 %v308
    %330 = vmatpush.bf16.msra.mxu0 %v307
    %331 = vmatmul.bf16.gmra.mxu0 %v254
    %v332 = vpop.f32.mrf.mxu0
    %v333 = vadd.f32 %v273, %v332
    %v334 = vpop.f32.mrf.mxu0
    %335 = vdwg.mxu0
    %v336 = vmin.f32 %v333, 0.0
    %vm337 = vcmp.gt.f32.partialorder %v333, 0.0
    %v338 = vmul.f32 %v336, 1.442695
    %v339 = vpow.pop %v338
    %v340 = vsub.f32 %v339, 1.0
    %v341 = vmul.f32 %v340, 1.6732632
    %v342 = vsel %vm337, %v333, %v341
    %v343 = vmul.f32 %v342, 1.050701
    %344 = vst [vmem:[%s7] sm:$0xff] %v343
    // Predicated region
    $region42: #{_forward_impl.1} parent=1 // pred_check
      _
    $region43: #{_forward_impl.1} parent=1 // pred_check_branch
      %346 = sbr.rel (0) target = $region45
    $region44: #{_forward_impl.1} parent=1 // pred_region
      _
    $region45: #{_forward_impl.1} parent=1 // pred_fallthru
      _
    // Predicated region
    $region46: #{_forward_impl.1} parent=1 // pred_check
      _
    $region47: #{_forward_impl.1} parent=1 // pred_check_branch
      %348 = sbr.rel (0) target = $region49
    $region48: #{_forward_impl.1} parent=1 // pred_region
      _
    $region49: #{_forward_impl.1} parent=1 // pred_fallthru
      _
    %349 = vsyncpa [#allocation3], 1
    %350 = vsyncpa [#allocation5], 1

</llo_original>
